<compile_context>
chip_gen: v7x
topology: tpu7x:2x2x1
jax: 0.10.0
libtpu: 0.0.40
codegen_flags: <defaults>
</compile_context>

<pallas_src>
import functools

import jax
import jax.numpy as jnp
from jax.experimental import pallas as pl
from jax.experimental.pallas import tpu as pltpu

LANE = 128


def _round_up(x, m):
    return ((x + m - 1) // m) * m


# ----------------------------------------------------------------------------- kernel
def _actor_kernel(x_ref, w1_ref, b1_ref, w2_ref, b2_ref, w3_ref, b3_ref,
                  out_ref, *, max_action):
    cdt = w1_ref.dtype                       # MXU operand dtype (f32 or bf16)

    x = x_ref[...].astype(cdt)                                        # (TB, D)

    # l1: (TB, D) @ (D, Hp) -> f32 accumulator, bias/relu in f32.
    h = jnp.dot(x, w1_ref[...], preferred_element_type=jnp.float32) + b1_ref[...]
    h = jnp.maximum(h, 0.0)

    # l2: (TB, Hp) @ (Hp, Hp)
    h = jnp.dot(h.astype(cdt), w2_ref[...],
                preferred_element_type=jnp.float32) + b2_ref[...]
    h = jnp.maximum(h, 0.0)

    # l3 + tanh head: (TB, Hp) @ (Hp, A)
    a = jnp.dot(h.astype(cdt), w3_ref[...],
                preferred_element_type=jnp.float32) + b3_ref[...]
    a = jnp.tanh(a) * max_action                                      # f32 epilogue

    out_ref[...] = a.astype(out_ref.dtype)                            # (TB, A)


# ----------------------------------------------------------------------------- wrapper
def actor_forward(state, hidden, padded_params, *, action_dim, max_action):
    """Non-recurrent TD3 Actor forward. Returns (action, hidden) like the PyTorch
    module (hidden is untouched in the non-recurrent branch)."""
    w1, b1, w2, b2, w3, b3 = padded_params
    D, Hp = w1.shape            # D is the true (unpadded) state dim
    A = w3.shape[1]             # true (unpadded) action dim

    B, Dx = state.shape
    assert Dx == D, f"state dim {Dx} != weight dim {D}"
    assert A == action_dim

    x = state if state.dtype == jnp.float32 else state.astype(jnp.float32)

    # --- batch tiling ---------------------------------------------------------
    # Pad waste bounded by <8 rows per tile; keep >=2 grid steps for large
    # batches so the "parallel" batch axis can shard across v7x's 2 TensorCores.
    B8 = _round_up(B, 8)
    TB_CAP = 1024
    n_tiles = max(1, -(-B8 // TB_CAP))
    if B8 >= 64:
        n_tiles = max(n_tiles, 2)
    TB = _round_up(-(-B8 // n_tiles), 8)
    B_pad = n_tiles * TB
    if B_pad != B:
        x = jnp.pad(x, ((0, B_pad - B), (0, 0)))
    grid = (n_tiles,)

    # --- advisory cost estimate (actual dims, not a 128-padded fiction) -------
    flops = 2 * B_pad * (D * Hp + Hp * Hp + Hp * A)
    transcendentals = B_pad * A
    w_itemsize = jnp.dtype(w1.dtype).itemsize
    weight_bytes = w_itemsize * (D * Hp + Hp * Hp + Hp * A) + 4 * (2 * Hp + A)
    bytes_accessed = 4 * (B_pad * D + B_pad * A) + weight_bytes

    # --- VMEM budget: resident weights + double-buffered x/out tiles + the two
    # (TB, Hp) f32 intermediates, with headroom; well under v7x's 64 MiB. ------
    act_bytes = 4 * TB * (D + 2 * Hp + A)
    vmem_limit = int(min(64 << 20,
                         max(8 << 20, 2 * (weight_bytes + 2 * act_bytes) + (2 << 20))))

    kernel = functools.partial(_actor_kernel, max_action=float(max_action))

    out = pl.pallas_call(
        kernel,
        out_shape=jax.ShapeDtypeStruct((B_pad, A), jnp.float32),
        grid=grid,
        in_specs=[
            pl.BlockSpec((TB, D), lambda i: (i, 0)),      # activation tile (pipelined)
            pl.BlockSpec((D, Hp), lambda i: (0, 0)),      # weights stay resident
            pl.BlockSpec((1, Hp), lambda i: (0, 0)),
            pl.BlockSpec((Hp, Hp), lambda i: (0, 0)),
            pl.BlockSpec((1, Hp), lambda i: (0, 0)),
            pl.BlockSpec((Hp, A), lambda i: (0, 0)),
            pl.BlockSpec((1, A), lambda i: (0, 0)),
        ],
        out_specs=pl.BlockSpec((TB, A), lambda i: (i, 0)),  # full-dim last axis
        compiler_params=pltpu.CompilerParams(
            dimension_semantics=("parallel",),
            vmem_limit_bytes=vmem_limit),
        cost_estimate=pl.CostEstimate(
            flops=flops,
            transcendentals=transcendentals,
            bytes_accessed=bytes_accessed),
    )(x, w1, b1, w2, b2, w3, b3)

    if B_pad != B:
        out = out[:B]           # drop padded batch rows (columns already exact)
    return out, hidden


# ----------------------------------------------------------------------------- params
def _linear_params(key, fan_in, fan_out):
    """PyTorch-style uniform(-1/sqrt(fan_in), 1/sqrt(fan_in)) init; weight stored
    as (in, out) so the kernel computes x @ W."""
    kw, kb = jax.random.split(key)
    bound = 1.0 / jnp.sqrt(jnp.array(fan_in, jnp.float32))
    w = jax.random.uniform(kw, (fan_in, fan_out), jnp.float32, -bound, bound)
    b = jax.random.uniform(kb, (1, fan_out), jnp.float32, -bound, bound)
    return w, b


def make_actor_params(key, state_dim, action_dim, hidden_dim):
    keys = jax.random.split(key, 3)
    w1, b1 = _linear_params(keys[0], state_dim, hidden_dim)
    w2, b2 = _linear_params(keys[1], hidden_dim, hidden_dim)
    w3, b3 = _linear_params(keys[2], hidden_dim, action_dim)
    return (w1, b1, w2, b2, w3, b3)


def pad_actor_params(params, lane=LANE, dtype=jnp.float32):
    """Pad only the *hidden* dim to the lane width (zero padding is exact:
    padded hidden columns are identically zero through the ReLUs).  The state
    dim (K of l1) and action dim (N of l3 / output) stay unpadded.  Weights may
    be stored in bf16 (halves weight DMA, native MXU path on v6e/v7x); biases
    stay f32 since the epilogue accumulates in f32."""
    w1, b1, w2, b2, w3, b3 = params
    D, H = w1.shape
    A = w3.shape[1]
    Hp = _round_up(H, lane)

    def pad2(a, rows, cols, dt):
        return jnp.pad(a, ((0, rows - a.shape[0]), (0, cols - a.shape[1]))).astype(dt)

    return (pad2(w1, D, Hp, dtype), pad2(b1, 1, Hp, jnp.float32),
            pad2(w2, Hp, Hp, dtype), pad2(b2, 1, Hp, jnp.float32),
            pad2(w3, Hp, A, dtype), pad2(b3, 1, A, jnp.float32))


# ----------------------------------------------------------------------------- reference
def _reference_forward(state, params, max_action):
    """Plain-JAX reference mirroring the PyTorch module (non-recurrent)."""
    w1, b1, w2, b2, w3, b3 = params
    a = jnp.maximum(state @ w1 + b1, 0.0)
    a = jnp.maximum(a @ w2 + b2, 0.0)
    a = jnp.tanh(a @ w3 + b3)
    return max_action * a


# ----------------------------------------------------------------------------- main
if __name__ == "__main__":
    state_dim, action_dim, hidden_dim = 12, 4, 32
    max_action = 2.0
    batch = 8

    key = jax.random.PRNGKey(0)
    k_params, k_state = jax.random.split(key, 2)

    params = make_actor_params(k_params, state_dim, action_dim, hidden_dim)
    state = jax.random.normal(k_state, (batch, state_dim), jnp.float32)
    hidden = None  # unused in the non-recurrent path, passed through unchanged

    ref = _reference_forward(state, params, max_action)

    # f32 weight storage (default, exact vs. the f32 reference).
    padded_f32 = pad_actor_params(params, dtype=jnp.float32)
    action, h_out = actor_forward(state, hidden, padded_f32,
                                  action_dim=action_dim, max_action=max_action)
    action = jax.block_until_ready(action)
    assert action.shape == (batch, action_dim)
    assert h_out is hidden
    assert jnp.allclose(action, ref, atol=1e-4, rtol=1e-4)

    # bf16 weight/operand storage (v6e/v7x DMA-byte optimization), f32 accumulate.
    padded_bf16 = pad_actor_params(params, dtype=jnp.bfloat16)
    action_bf16, _ = actor_forward(state, hidden, padded_bf16,
                                   action_dim=action_dim, max_action=max_action)
    action_bf16 = jax.block_until_ready(action_bf16)
    assert jnp.allclose(action_bf16, ref, atol=5e-2, rtol=5e-2)

    print("KERNEL_OK")
</pallas_src>

<mosaic_0001>
module attributes {stable_mosaic.version = 11 : i64} {
  func.func @_actor_kernel(%arg0: i32, %arg1: memref<8x12xf32, #tpu.memory_space<vmem>>, %arg2: memref<12x128xf32, #tpu.memory_space<vmem>>, %arg3: memref<1x128xf32, #tpu.memory_space<vmem>>, %arg4: memref<128x128xf32, #tpu.memory_space<vmem>>, %arg5: memref<1x128xf32, #tpu.memory_space<vmem>>, %arg6: memref<128x4xf32, #tpu.memory_space<vmem>>, %arg7: memref<1x4xf32, #tpu.memory_space<vmem>>, %arg8: memref<8x4xf32, #tpu.memory_space<vmem>>) attributes {dimension_semantics = [#tpu.dimension_semantics<parallel>], iteration_bounds = array<i64: 1>, scalar_prefetch = 0 : i64, scratch_operands = 0 : i64, tpu.core_type = #tpu.core_type<tc>, window_params = [{transform_indices = @transform_0, window_bounds = array<i64: 8, 12>}, {pipeline_mode = #tpu.pipeline_mode<synchronous>, transform_indices = @transform_1, window_bounds = array<i64: 12, 128>}, {pipeline_mode = #tpu.pipeline_mode<synchronous>, transform_indices = @transform_2, window_bounds = array<i64: 1, 128>}, {pipeline_mode = #tpu.pipeline_mode<synchronous>, transform_indices = @transform_3, window_bounds = array<i64: 128, 128>}, {pipeline_mode = #tpu.pipeline_mode<synchronous>, transform_indices = @transform_4, window_bounds = array<i64: 1, 128>}, {pipeline_mode = #tpu.pipeline_mode<synchronous>, transform_indices = @transform_5, window_bounds = array<i64: 128, 4>}, {pipeline_mode = #tpu.pipeline_mode<synchronous>, transform_indices = @transform_6, window_bounds = array<i64: 1, 4>}, {transform_indices = @transform_7, window_bounds = array<i64: 8, 4>}]} {
    %c0 = arith.constant 0 : index
    %c0_0 = arith.constant 0 : index
    %0 = vector.load %arg1[%c0, %c0_0] : memref<8x12xf32, #tpu.memory_space<vmem>>, vector<8x12xf32>
    %c0_1 = arith.constant 0 : index
    %c0_2 = arith.constant 0 : index
    %1 = vector.load %arg2[%c0_1, %c0_2] : memref<12x128xf32, #tpu.memory_space<vmem>>, vector<12x128xf32>
    %cst = arith.constant dense<0.000000e+00> : vector<8x128xf32>
    %2 = tpu.matmul %0, %1, %cst {dimension_numbers = #tpu.dot_dimension_numbers<[1], [0], [0], [1], [0, 0, 1, 1], [], []>} : vector<8x12xf32>, vector<12x128xf32>, vector<8x128xf32> -> vector<8x128xf32>
    %c0_3 = arith.constant 0 : index
    %c0_4 = arith.constant 0 : index
    %3 = vector.load %arg3[%c0_3, %c0_4] : memref<1x128xf32, #tpu.memory_space<vmem>>, vector<1x128xf32>
    %4 = vector.broadcast %3 : vector<1x128xf32> to vector<8x128xf32>
    %5 = arith.addf %2, %4 : vector<8x128xf32>
    %cst_5 = arith.constant 0.000000e+00 : f32
    %6 = vector.broadcast %cst_5 : f32 to vector<8x128xf32>
    %7 = arith.maximumf %5, %6 : vector<8x128xf32>
    %c0_6 = arith.constant 0 : index
    %c0_7 = arith.constant 0 : index
    %8 = vector.load %arg4[%c0_6, %c0_7] : memref<128x128xf32, #tpu.memory_space<vmem>>, vector<128x128xf32>
    %cst_8 = arith.constant dense<0.000000e+00> : vector<8x128xf32>
    %9 = tpu.matmul %7, %8, %cst_8 {dimension_numbers = #tpu.dot_dimension_numbers<[1], [0], [0], [1], [0, 0, 1, 1], [], []>} : vector<8x128xf32>, vector<128x128xf32>, vector<8x128xf32> -> vector<8x128xf32>
    %c0_9 = arith.constant 0 : index
    %c0_10 = arith.constant 0 : index
    %10 = vector.load %arg5[%c0_9, %c0_10] : memref<1x128xf32, #tpu.memory_space<vmem>>, vector<1x128xf32>
    %11 = vector.broadcast %10 : vector<1x128xf32> to vector<8x128xf32>
    %12 = arith.addf %9, %11 : vector<8x128xf32>
    %cst_11 = arith.constant 0.000000e+00 : f32
    %13 = vector.broadcast %cst_11 : f32 to vector<8x128xf32>
    %14 = arith.maximumf %12, %13 : vector<8x128xf32>
    %c0_12 = arith.constant 0 : index
    %c0_13 = arith.constant 0 : index
    %15 = vector.load %arg6[%c0_12, %c0_13] : memref<128x4xf32, #tpu.memory_space<vmem>>, vector<128x4xf32>
    %cst_14 = arith.constant dense<0.000000e+00> : vector<8x4xf32>
    %16 = tpu.matmul %14, %15, %cst_14 {dimension_numbers = #tpu.dot_dimension_numbers<[1], [0], [0], [1], [0, 0, 1, 1], [], []>} : vector<8x128xf32>, vector<128x4xf32>, vector<8x4xf32> -> vector<8x4xf32>
    %c0_15 = arith.constant 0 : index
    %c0_16 = arith.constant 0 : index
    %17 = vector.load %arg7[%c0_15, %c0_16] : memref<1x4xf32, #tpu.memory_space<vmem>>, vector<1x4xf32>
    %18 = vector.broadcast %17 : vector<1x4xf32> to vector<8x4xf32>
    %19 = arith.addf %16, %18 : vector<8x4xf32>
    %20 = math.tanh %19 : vector<8x4xf32>
    %cst_17 = arith.constant 2.000000e+00 : f32
    %21 = vector.broadcast %cst_17 : f32 to vector<8x4xf32>
    %22 = arith.mulf %20, %21 : vector<8x4xf32>
    %c0_18 = arith.constant 0 : index
    %c0_19 = arith.constant 0 : index
    %23 = vector.load %arg8[%c0_18, %c0_19] : memref<8x4xf32, #tpu.memory_space<vmem>>, vector<8x4xf32>
    tpu.vector_store %arg8[%c0_18, %c0_19], %22 {strides = array<i32>} : memref<8x4xf32, #tpu.memory_space<vmem>>, vector<8x4xf32>,
    return
  }
  func.func @transform_0(%arg0: i32) -> (i32, i32) {
    %c0_i32 = arith.constant 0 : i32
    %c0_i32_0 = arith.constant 0 : i32
    return %arg0, %c0_i32 : i32, i32
  }
  func.func @transform_1(%arg0: i32) -> (i32, i32) {
    %c0_i32 = arith.constant 0 : i32
    %c0_i32_0 = arith.constant 0 : i32
    %c0_i32_1 = arith.constant 0 : i32
    return %c0_i32, %c0_i32_0 : i32, i32
  }
  func.func @transform_2(%arg0: i32) -> (i32, i32) {
    %c0_i32 = arith.constant 0 : i32
    %c0_i32_0 = arith.constant 0 : i32
    %c0_i32_1 = arith.constant 0 : i32
    return %c0_i32, %c0_i32_0 : i32, i32
  }
  func.func @transform_3(%arg0: i32) -> (i32, i32) {
    %c0_i32 = arith.constant 0 : i32
    %c0_i32_0 = arith.constant 0 : i32
    %c0_i32_1 = arith.constant 0 : i32
    return %c0_i32, %c0_i32_0 : i32, i32
  }
  func.func @transform_4(%arg0: i32) -> (i32, i32) {
    %c0_i32 = arith.constant 0 : i32
    %c0_i32_0 = arith.constant 0 : i32
    %c0_i32_1 = arith.constant 0 : i32
    return %c0_i32, %c0_i32_0 : i32, i32
  }
  func.func @transform_5(%arg0: i32) -> (i32, i32) {
    %c0_i32 = arith.constant 0 : i32
    %c0_i32_0 = arith.constant 0 : i32
    %c0_i32_1 = arith.constant 0 : i32
    return %c0_i32, %c0_i32_0 : i32, i32
  }
  func.func @transform_6(%arg0: i32) -> (i32, i32) {
    %c0_i32 = arith.constant 0 : i32
    %c0_i32_0 = arith.constant 0 : i32
    %c0_i32_1 = arith.constant 0 : i32
    return %c0_i32, %c0_i32_0 : i32, i32
  }
  func.func @transform_7(%arg0: i32) -> (i32, i32) {
    %c0_i32 = arith.constant 0 : i32
    %c0_i32_0 = arith.constant 0 : i32
    return %arg0, %c0_i32 : i32, i32
  }
}

</mosaic_0001>

<llo_original>
// kernel: tpu_custom_call.1
$region0: #{tpu_custom_call.1}
  #allocation0 [shape = 'u32[]', space=smem, size = 0x4, offset = 0x4, fixed_abs, tag = 'smem constant byte address 0x4 - core index']
  #allocation1 [shape = 'u32[144,128]{1,0:T(1,128)}', space=vmem, size = 0x12000, scoped, tag = 'internal scratch']
  %s0 = inlined_call_operand.vmem [shape: f32[8,12], index: 0, kind: input, shape index: {}]
  %s1 = inlined_call_operand.hbm [shape: f32[12,128], index: 1, kind: input, shape index: {}]
  %s2 = inlined_call_operand.vmem [shape: f32[1,128], index: 2, kind: input, shape index: {}]
  %s3 = inlined_call_operand.vmem [shape: f32[128,128], index: 3, kind: input, shape index: {}]
  %s4 = inlined_call_operand.vmem [shape: f32[1,128], index: 4, kind: input, shape index: {}]
  %s5 = inlined_call_operand.vmem [shape: f32[128,4], index: 5, kind: input, shape index: {}]
  %s6 = inlined_call_operand.vmem [shape: f32[1,4], index: 6, kind: input, shape index: {}]
  %s7 = inlined_call_operand.vmem [shape: f32[8,4], index: 7, kind: output, shape index: {}]
  %s8 = sld [smem:[#allocation0]]
  $region42: #{tpu_custom_call.1} parent=0
    _
  %s10 = ssub.s32 1, %s8
  %s11 = scalar_select 0, %s10, %s8
  $region1: #{tpu_custom_call.1} parent=0
    #allocation2 [shape = 'u8[8192]{0}', space=vmem, size = 0x2000, scoped, tag = 'input window, operand 1, single buffered']
    #allocation3 [shape = 's32[1]{0}', space=sflag, size = 0x4, scoped, tag = 'scoped memory for tpu_custom_call.1']
    %12 = vsyncpa [#allocation3], 0
    // Predicated region
    $region2: #{tpu_custom_call.1} parent=1 // pred_check
      _
    $region3: #{tpu_custom_call.1} parent=1 // pred_check_branch
      %14 = sbr.rel (0) target = $region5
    $region4: #{tpu_custom_call.1} parent=1 // pred_region
      _
    $region5: #{tpu_custom_call.1} parent=1 // pred_fallthru
      _
    // Predicated region
    $region6: #{tpu_custom_call.1} parent=1 // pred_check
      _
    $region7: #{tpu_custom_call.1} parent=1 // pred_check_branch
      %16 = sbr.rel (0) target = $region9
    $region8: #{tpu_custom_call.1} parent=1 // pred_region
      %s18 = ssub.s32 256, 256
      %19 = vsyncadd [#allocation3], %s18
      %s20 = sshll.u32 [#allocation2], 4
      %s21 = int_to_ptr.vmem [resolvable:$true] %s20
      %26 = dma.hbm_to_vmem [thread:$0]  %s1, 256, %s21, [#allocation3], 128, 128, 8
    $region9: #{tpu_custom_call.1} parent=1 // pred_fallthru
      _
    // Predicated region
    $region10: #{tpu_custom_call.1} parent=1 // pred_check
      _
    $region11: #{tpu_custom_call.1} parent=1 // pred_check_branch
      %28 = sbr.rel (0) target = $region13
    $region12: #{tpu_custom_call.1} parent=1 // pred_region
      _
    $region13: #{tpu_custom_call.1} parent=1 // pred_fallthru
      _
    // Predicated region
    $region14: #{tpu_custom_call.1} parent=1 // pred_check
      _
    $region15: #{tpu_custom_call.1} parent=1 // pred_check_branch
      %30 = sbr.rel (0) target = $region17
    $region16: #{tpu_custom_call.1} parent=1 // pred_region
      _
    $region17: #{tpu_custom_call.1} parent=1 // pred_fallthru
      _
    // Predicated region
    $region18: #{tpu_custom_call.1} parent=1 // pred_check
      _
    $region19: #{tpu_custom_call.1} parent=1 // pred_check_branch
      %32 = sbr.rel (0) target = $region21
    $region20: #{tpu_custom_call.1} parent=1 // pred_region
      _
    $region21: #{tpu_custom_call.1} parent=1 // pred_fallthru
      _
    // Predicated region
    $region22: #{tpu_custom_call.1} parent=1 // pred_check
      _
    $region23: #{tpu_custom_call.1} parent=1 // pred_check_branch
      %34 = sbr.rel (0) target = $region25
    $region24: #{tpu_custom_call.1} parent=1 // pred_region
      _
    $region25: #{tpu_custom_call.1} parent=1 // pred_fallthru
      _
    // Predicated region
    $region26: #{tpu_custom_call.1} parent=1 // pred_check
      _
    $region27: #{tpu_custom_call.1} parent=1 // pred_check_branch
      %36 = sbr.rel (0) target = $region29
    $region28: #{tpu_custom_call.1} parent=1 // pred_region
      _
    $region29: #{tpu_custom_call.1} parent=1 // pred_fallthru
      _
    // Predicated region
    $region30: #{tpu_custom_call.1} parent=1 // pred_check
      _
    $region31: #{tpu_custom_call.1} parent=1 // pred_check_branch
      %38 = sbr.rel (0) target = $region33
    $region32: #{tpu_custom_call.1} parent=1 // pred_region
      %39 = dma.done [#allocation3], 256
    $region33: #{tpu_custom_call.1} parent=1 // pred_fallthru
      _
    %v40 = vld [vmem:[%s0] sm:$0xff]
    %v41 = vld [vmem:[#allocation2] sm:$0xff]
    %v42 = vld [vmem:[#allocation2 + $0x8] sm:$0xf]
    %v43 = vld [vmem:[%s2] sm:$0x1]
    %v45 = vlaneseq
    %v46 = vshrl.u32 %v45, 7
    %v47 = vsub.s32 0, %v46
    %v48 = vrot.slane %v43, %v47
    %vm50 = vcmask 97280
    %v52 = vsel %vm50, %v40, 0
    %vm54 = vcmask 1043456
    %v56 = vsel %vm54, %v42, 0
    %58 = vmatprep.subr.mxu0 0.0
    %59 = vmatpush1.msra.mxu0 %v41
    %60 = vmatprep.subr.mxu0 0.0
    %61 = vmatpush1.msra.mxu0 %v56
    %62 = vmatprep.subr.mxu0 0.0
    %63 = vmatpush1.msra.mxu0 0.0
    %64 = vmatprep.subr.mxu0 0.0
    %65 = vmatpush1.msra.mxu0 0.0
    %66 = vmatprep.subr.mxu0 0.0
    %67 = vmatpush1.msra.mxu0 0.0
    %68 = vmatprep.subr.mxu0 0.0
    %69 = vmatpush1.msra.mxu0 0.0
    %70 = vmatprep.subr.mxu0 0.0
    %71 = vmatpush1.msra.mxu0 0.0
    %72 = vmatprep.subr.mxu0 0.0
    %73 = vmatpush1.msra.mxu0 0.0
    %74 = vmatprep.subr.mxu0 0.0
    %75 = vmatpush1.msra.mxu0 0.0
    %76 = vmatprep.subr.mxu0 0.0
    %77 = vmatpush1.msra.mxu0 0.0
    %78 = vmatprep.subr.mxu0 0.0
    %79 = vmatpush1.msra.mxu0 0.0
    %80 = vmatprep.subr.mxu0 0.0
    %81 = vmatpush1.msra.mxu0 0.0
    %82 = vmatprep.subr.mxu0 0.0
    %83 = vmatpush1.msra.mxu0 0.0
    %84 = vmatprep.subr.mxu0 0.0
    %85 = vmatpush1.msra.mxu0 0.0
    %86 = vmatprep.subr.mxu0 0.0
    %87 = vmatpush1.msra.mxu0 0.0
    %88 = vmatprep.subr.mxu0 0.0
    %89 = vmatpush1.msra.mxu0 0.0
    %90 = vmatprep.subr.mxu0 0.0
    %91 = vmatpush1.msra.mxu0 0.0
    %92 = vmatprep.subr.mxu0 0.0
    %93 = vmatpush1.msra.mxu0 0.0
    %94 = vmatprep.subr.mxu0 0.0
    %95 = vmatpush1.msra.mxu0 0.0
    %96 = vmatprep.subr.mxu0 0.0
    %97 = vmatpush1.msra.mxu0 0.0
    %98 = vmatprep.subr.mxu0 0.0
    %99 = vmatpush1.msra.mxu0 0.0
    %100 = vmatprep.subr.mxu0 0.0
    %101 = vmatpush1.msra.mxu0 0.0
    %102 = vmatprep.subr.mxu0 0.0
    %103 = vmatpush1.msra.mxu0 0.0
    %104 = vmatprep.subr.mxu0 0.0
    %105 = vmatpush1.msra.mxu0 0.0
    %106 = vmatprep.subr.mxu0 0.0
    %107 = vmatpush1.msra.mxu0 0.0
    %108 = vmatprep.subr.mxu0 0.0
    %109 = vmatpush1.msra.mxu0 0.0
    %110 = vmatprep.subr.mxu0 0.0
    %111 = vmatpush1.msra.mxu0 0.0
    %112 = vmatprep.subr.mxu0 0.0
    %113 = vmatpush1.msra.mxu0 0.0
    %114 = vmatprep.subr.mxu0 0.0
    %115 = vmatpush1.msra.mxu0 0.0
    %116 = vmatprep.subr.mxu0 0.0
    %117 = vmatpush1.msra.mxu0 0.0
    %118 = vmatprep.subr.mxu0 0.0
    %119 = vmatpush1.msra.mxu0 0.0
    %120 = vmatprep.subr.mxu0 0.0
    %121 = vmatpush1.msra.mxu0 0.0
    %122 = vmatprep.mubr.f32.mxu0 0.0
    %123 = vmatmul.mubr.f32.gmra.mrb[0].mxu0 %v52
    %v124 = vpop.f32.mrb[0].mxu0
    %v125 = vadd.f32 %v48, %v124
    %v126 = vpop.f32.mrb[0].mxu0
    %127 = vdwg.mxu0
    %v128 = vmax.f32 %v125, 0.0
    %v129 = vld [vmem:[%s3] sm:$0xff]
    %v130 = vld [vmem:[%s3 + $0x8] sm:$0xff]
    %v131 = vld [vmem:[%s3 + $0x10] sm:$0xff]
    %v132 = vld [vmem:[%s3 + $0x18] sm:$0xff]
    %v133 = vld [vmem:[%s3 + $0x20] sm:$0xff]
    %v134 = vld [vmem:[%s3 + $0x28] sm:$0xff]
    %v135 = vld [vmem:[%s3 + $0x30] sm:$0xff]
    %v136 = vld [vmem:[%s3 + $0x38] sm:$0xff]
    %v137 = vld [vmem:[%s3 + $0x40] sm:$0xff]
    %v138 = vld [vmem:[%s3 + $0x48] sm:$0xff]
    %v139 = vld [vmem:[%s3 + $0x50] sm:$0xff]
    %v140 = vld [vmem:[%s3 + $0x58] sm:$0xff]
    %v141 = vld [vmem:[%s3 + $0x60] sm:$0xff]
    %v142 = vld [vmem:[%s3 + $0x68] sm:$0xff]
    %v143 = vld [vmem:[%s3 + $0x70] sm:$0xff]
    %v144 = vld [vmem:[%s3 + $0x78] sm:$0xff]
    %v145 = vld [vmem:[%s4] sm:$0x1]
    %v147 = vlaneseq
    %v148 = vshrl.u32 %v147, 7
    %v149 = vsub.s32 0, %v148
    %v150 = vrot.slane %v145, %v149
    %152 = vmatprep.subr.mxu0 0.0
    %153 = vmatpush1.msra.mxu0 %v129
    %154 = vmatprep.subr.mxu0 0.0
    %155 = vmatpush1.msra.mxu0 %v130
    %156 = vmatprep.subr.mxu0 0.0
    %157 = vmatpush1.msra.mxu0 %v131
    %158 = vmatprep.subr.mxu0 0.0
    %159 = vmatpush1.msra.mxu0 %v132
    %160 = vmatprep.subr.mxu0 0.0
    %161 = vmatpush1.msra.mxu0 %v133
    %162 = vmatprep.subr.mxu0 0.0
    %163 = vmatpush1.msra.mxu0 %v134
    %164 = vmatprep.subr.mxu0 0.0
    %165 = vmatpush1.msra.mxu0 %v135
    %166 = vmatprep.subr.mxu0 0.0
    %167 = vmatpush1.msra.mxu0 %v136
    %168 = vmatprep.subr.mxu0 0.0
    %169 = vmatpush1.msra.mxu0 %v137
    %170 = vmatprep.subr.mxu0 0.0
    %171 = vmatpush1.msra.mxu0 %v138
    %172 = vmatprep.subr.mxu0 0.0
    %173 = vmatpush1.msra.mxu0 %v139
    %174 = vmatprep.subr.mxu0 0.0
    %175 = vmatpush1.msra.mxu0 %v140
    %176 = vmatprep.subr.mxu0 0.0
    %177 = vmatpush1.msra.mxu0 %v141
    %178 = vmatprep.subr.mxu0 0.0
    %179 = vmatpush1.msra.mxu0 %v142
    %180 = vmatprep.subr.mxu0 0.0
    %181 = vmatpush1.msra.mxu0 %v143
    %182 = vmatprep.subr.mxu0 0.0
    %183 = vmatpush1.msra.mxu0 %v144
    %184 = vmatprep.subr.mxu0 0.0
    %185 = vmatpush1.msra.mxu0 0.0
    %186 = vmatprep.subr.mxu0 0.0
    %187 = vmatpush1.msra.mxu0 0.0
    %188 = vmatprep.subr.mxu0 0.0
    %189 = vmatpush1.msra.mxu0 0.0
    %190 = vmatprep.subr.mxu0 0.0
    %191 = vmatpush1.msra.mxu0 0.0
    %192 = vmatprep.subr.mxu0 0.0
    %193 = vmatpush1.msra.mxu0 0.0
    %194 = vmatprep.subr.mxu0 0.0
    %195 = vmatpush1.msra.mxu0 0.0
    %196 = vmatprep.subr.mxu0 0.0
    %197 = vmatpush1.msra.mxu0 0.0
    %198 = vmatprep.subr.mxu0 0.0
    %199 = vmatpush1.msra.mxu0 0.0
    %200 = vmatprep.subr.mxu0 0.0
    %201 = vmatpush1.msra.mxu0 0.0
    %202 = vmatprep.subr.mxu0 0.0
    %203 = vmatpush1.msra.mxu0 0.0
    %204 = vmatprep.subr.mxu0 0.0
    %205 = vmatpush1.msra.mxu0 0.0
    %206 = vmatprep.subr.mxu0 0.0
    %207 = vmatpush1.msra.mxu0 0.0
    %208 = vmatprep.subr.mxu0 0.0
    %209 = vmatpush1.msra.mxu0 0.0
    %210 = vmatprep.subr.mxu0 0.0
    %211 = vmatpush1.msra.mxu0 0.0
    %212 = vmatprep.subr.mxu0 0.0
    %213 = vmatpush1.msra.mxu0 0.0
    %214 = vmatprep.subr.mxu0 0.0
    %215 = vmatpush1.msra.mxu0 0.0
    %216 = vmatprep.mubr.f32.mxu0 0.0
    %217 = vmatmul.mubr.f32.gmra.mrb[0].mxu0 %v128
    %v218 = vpop.f32.mrb[0].mxu0
    %v219 = vadd.f32 %v150, %v218
    %v220 = vpop.f32.mrb[0].mxu0
    %221 = vdwg.mxu0
    %v222 = vmax.f32 %v219, 0.0
    %v223 = vld [vmem:[%s5] sm:$0xff]
    %v224 = vld [vmem:[%s5 + $0x8] sm:$0xff]
    %v225 = vld [vmem:[%s5 + $0x10] sm:$0xff]
    %v226 = vld [vmem:[%s5 + $0x18] sm:$0xff]
    %v227 = vld [vmem:[%s5 + $0x20] sm:$0xff]
    %v228 = vld [vmem:[%s5 + $0x28] sm:$0xff]
    %v229 = vld [vmem:[%s5 + $0x30] sm:$0xff]
    %v230 = vld [vmem:[%s5 + $0x38] sm:$0xff]
    %v231 = vld [vmem:[%s5 + $0x40] sm:$0xff]
    %v232 = vld [vmem:[%s5 + $0x48] sm:$0xff]
    %v233 = vld [vmem:[%s5 + $0x50] sm:$0xff]
    %v234 = vld [vmem:[%s5 + $0x58] sm:$0xff]
    %v235 = vld [vmem:[%s5 + $0x60] sm:$0xff]
    %v236 = vld [vmem:[%s5 + $0x68] sm:$0xff]
    %v237 = vld [vmem:[%s5 + $0x70] sm:$0xff]
    %v238 = vld [vmem:[%s5 + $0x78] sm:$0xff]
    %v239 = vld [vmem:[%s6] sm:$0x1]
    %v241 = vlaneseq
    %v242 = vshrl.u32 %v241, 7
    %v243 = vsub.s32 0, %v242
    %v244 = vrot.slane %v239, %v243
    %246 = vmatprep.subr.mxu0 0.0
    %247 = vmatpush1.msra.mxu0 %v223
    %248 = vmatprep.subr.mxu0 0.0
    %249 = vmatpush1.msra.mxu0 %v224
    %250 = vmatprep.subr.mxu0 0.0
    %251 = vmatpush1.msra.mxu0 %v225
    %252 = vmatprep.subr.mxu0 0.0
    %253 = vmatpush1.msra.mxu0 %v226
    %254 = vmatprep.subr.mxu0 0.0
    %255 = vmatpush1.msra.mxu0 %v227
    %256 = vmatprep.subr.mxu0 0.0
    %257 = vmatpush1.msra.mxu0 %v228
    %258 = vmatprep.subr.mxu0 0.0
    %259 = vmatpush1.msra.mxu0 %v229
    %260 = vmatprep.subr.mxu0 0.0
    %261 = vmatpush1.msra.mxu0 %v230
    %262 = vmatprep.subr.mxu0 0.0
    %263 = vmatpush1.msra.mxu0 %v231
    %264 = vmatprep.subr.mxu0 0.0
    %265 = vmatpush1.msra.mxu0 %v232
    %266 = vmatprep.subr.mxu0 0.0
    %267 = vmatpush1.msra.mxu0 %v233
    %268 = vmatprep.subr.mxu0 0.0
    %269 = vmatpush1.msra.mxu0 %v234
    %270 = vmatprep.subr.mxu0 0.0
    %271 = vmatpush1.msra.mxu0 %v235
    %272 = vmatprep.subr.mxu0 0.0
    %273 = vmatpush1.msra.mxu0 %v236
    %274 = vmatprep.subr.mxu0 0.0
    %275 = vmatpush1.msra.mxu0 %v237
    %276 = vmatprep.subr.mxu0 0.0
    %277 = vmatpush1.msra.mxu0 %v238
    %278 = vmatprep.subr.mxu0 0.0
    %279 = vmatpush1.msra.mxu0 0.0
    %280 = vmatprep.subr.mxu0 0.0
    %281 = vmatpush1.msra.mxu0 0.0
    %282 = vmatprep.subr.mxu0 0.0
    %283 = vmatpush1.msra.mxu0 0.0
    %284 = vmatprep.subr.mxu0 0.0
    %285 = vmatpush1.msra.mxu0 0.0
    %286 = vmatprep.subr.mxu0 0.0
    %287 = vmatpush1.msra.mxu0 0.0
    %288 = vmatprep.subr.mxu0 0.0
    %289 = vmatpush1.msra.mxu0 0.0
    %290 = vmatprep.subr.mxu0 0.0
    %291 = vmatpush1.msra.mxu0 0.0
    %292 = vmatprep.subr.mxu0 0.0
    %293 = vmatpush1.msra.mxu0 0.0
    %294 = vmatprep.subr.mxu0 0.0
    %295 = vmatpush1.msra.mxu0 0.0
    %296 = vmatprep.subr.mxu0 0.0
    %297 = vmatpush1.msra.mxu0 0.0
    %298 = vmatprep.subr.mxu0 0.0
    %299 = vmatpush1.msra.mxu0 0.0
    %300 = vmatprep.subr.mxu0 0.0
    %301 = vmatpush1.msra.mxu0 0.0
    %302 = vmatprep.subr.mxu0 0.0
    %303 = vmatpush1.msra.mxu0 0.0
    %304 = vmatprep.subr.mxu0 0.0
    %305 = vmatpush1.msra.mxu0 0.0
    %306 = vmatprep.subr.mxu0 0.0
    %307 = vmatpush1.msra.mxu0 0.0
    %308 = vmatprep.subr.mxu0 0.0
    %309 = vmatpush1.msra.mxu0 0.0
    %310 = vmatprep.mubr.f32.mxu0 0.0
    %311 = vmatmul.mubr.f32.gmra.mrb[0].mxu0 %v222
    %v312 = vpop.f32.mrb[0].mxu0
    %v313 = vadd.f32 %v244, %v312
    %v314 = vpop.f32.mrb[0].mxu0
    %315 = vdwg.mxu0
    %v316 = vtanh.pop %v313
    %v317 = vmul.f32 %v316, 2.0
    %vm318 = vcmask 31744
    %319 = vst.msk [vmem:[%s7] sm:$0xff] %vm318, %v317
    // Predicated region
    $region34: #{tpu_custom_call.1} parent=1 // pred_check
      _
    $region35: #{tpu_custom_call.1} parent=1 // pred_check_branch
      %321 = sbr.rel (0) target = $region37
    $region36: #{tpu_custom_call.1} parent=1 // pred_region
      _
    $region37: #{tpu_custom_call.1} parent=1 // pred_fallthru
      _
    // Predicated region
    $region38: #{tpu_custom_call.1} parent=1 // pred_check
      _
    $region39: #{tpu_custom_call.1} parent=1 // pred_check_branch
      %323 = sbr.rel (0) target = $region41
    $region40: #{tpu_custom_call.1} parent=1 // pred_region
      _
    $region41: #{tpu_custom_call.1} parent=1 // pred_fallthru
      _
    %324 = vsyncpa [#allocation3], 1

</llo_original>
